<compile_context>
chip_gen: v5e
topology: v5e:2x2
jax: 0.10.0
libtpu: 0.0.40
codegen_flags: <defaults>
</compile_context>

<pallas_src>
import jax
import jax.numpy as jnp
from jax.experimental import pallas as pl
from jax.experimental.pallas import tpu as pltpu


def se_kernel(x_ref, w1_ref, b1_ref, w2_ref, b2_ref, out_ref):
    # x_ref: (bB, C, HW) block; HW on the lane axis, C on the sublane axis.
    x = x_ref[...]                                        # input dtype
    inv_hw = 1.0 / x.shape[-1]

    # --- squeeze: global average pool over spatial (lane-axis reduction) ---
    # f32 accumulation without materializing an f32 copy of the whole block.
    pooled = jnp.sum(x, axis=-1, dtype=jnp.float32) * inv_hw               # (bB, C)

    # --- excitation: FC -> ReLU -> FC -> sigmoid, batched over bB rows ---
    h = jnp.dot(pooled, w1_ref[...], preferred_element_type=jnp.float32)   # (bB, Ch)
    h = jnp.maximum(h + b1_ref[...], 0.0)
    s = jnp.dot(h, w2_ref[...], preferred_element_type=jnp.float32)        # (bB, C)
    s = jax.nn.sigmoid(s + b2_ref[...])

    # --- scale: broadcast per-channel gate along the lane (spatial) axis ---
    out_ref[...] = x * s.astype(x.dtype)[:, :, None]


def _device_profile():
    """(usable VMEM budget, min parallel grid steps, target block bytes)."""
    try:
        kind = jax.devices()[0].device_kind.lower()
    except Exception:
        kind = ""
    if "v7" in kind:
        # 64 MiB physical VMEM per TensorCore, 2 TCs -> want >=2 parallel steps.
        return 50 << 20, 2, 10 << 20
    # v5e / v6e (and default): 128 MiB VMEM, single TensorCore -> one big block.
    return 100 << 20, 1, 24 << 20


def _padded_bytes_per_batch(C, HW, itemsize):
    """Physical VMEM bytes of one batch element's (C, HW) tile after tiling pad."""
    sub = {4: 8, 2: 16, 1: 32}.get(itemsize, 8)     # sublane multiple per dtype
    c_pad = -(-C // sub) * sub
    hw_pad = -(-HW // 128) * 128                    # lane multiple
    return c_pad * hw_pad * itemsize


def _choose_batch_block(B, padded_per_batch, target_bytes, vmem_budget,
                        weight_bytes, min_steps):
    """Largest divisor of B near target_bytes that fits the (padded) VMEM budget."""
    hard_cap = max(1, (vmem_budget - weight_bytes - (2 << 20)) // (4 * padded_per_batch))
    cap = max(1, min(target_bytes // max(padded_per_batch, 1), hard_cap))
    if min_steps > 1 and B >= min_steps:
        cap = min(cap, B // min_steps)              # keep both v7x TCs busy
    cap = max(1, min(cap, B))
    for d in range(cap, 0, -1):                     # divisor -> no partial blocks
        if B % d == 0:
            return d
    return 1


def se_layer(x, w1, b1, w2, b2):
    """x: (B, C, H, W) NCHW. w1: (C, Ch), b1: (1, Ch), w2: (Ch, C), b2: (1, C)."""
    B, C, H, W = x.shape
    HW = H * W
    Ch = w1.shape[1]

    # Free reshape (no data movement): fold spatial onto the lane axis.
    x_r = x.reshape(B, C, HW)

    vmem_budget, min_steps, target_block = _device_profile()
    itemsize = x.dtype.itemsize
    padded_per_batch = _padded_bytes_per_batch(C, HW, itemsize)
    weight_bytes = 2 * 4 * (C * Ch + Ch + Ch * C + C)   # double-buffered f32 weights

    # TODO(synk): add HW tiling (two-pass pool-then-scale with a pooled
    # accumulator) for per-batch slabs too large for a single VMEM block.
    bB = _choose_batch_block(B, padded_per_batch, target_block, vmem_budget,
                             weight_bytes, min_steps)
    grid = (B // bB,)

    block_bytes = bB * padded_per_batch                  # padding-aware
    vmem_limit = int(min(4 * block_bytes + weight_bytes + (4 << 20), vmem_budget))
    vmem_limit = max(vmem_limit, 16 << 20)

    out = pl.pallas_call(
        se_kernel,
        out_shape=jax.ShapeDtypeStruct((B, C, HW), x.dtype),
        grid_spec=pltpu.PrefetchScalarGridSpec(
            num_scalar_prefetch=0,
            grid=grid,
            in_specs=[
                pl.BlockSpec((bB, C, HW), lambda b: (b, 0, 0)),
                pl.BlockSpec((C, Ch), lambda b: (0, 0)),
                pl.BlockSpec((1, Ch), lambda b: (0, 0)),
                pl.BlockSpec((Ch, C), lambda b: (0, 0)),
                pl.BlockSpec((1, C), lambda b: (0, 0)),
            ],
            out_specs=pl.BlockSpec((bB, C, HW), lambda b: (b, 0, 0)),
        ),
        compiler_params=pltpu.CompilerParams(
            dimension_semantics=("parallel",),
            vmem_limit_bytes=vmem_limit,
        ),
        # No input/output aliasing: the kernel consumes a view of the caller's
        # x, which is not donated.
    )(x_r, w1, b1, w2, b2)

    return out.reshape(B, C, H, W)


def reference_se(x, w1, b1, w2, b2):
    pooled = jnp.mean(x.astype(jnp.float32), axis=(2, 3))            # (B, C)
    h = jnp.maximum(pooled @ w1 + b1, 0.0)                           # (B, Ch)
    s = jax.nn.sigmoid(h @ w2 + b2)                                  # (B, C)
    return x * s[:, :, None, None].astype(x.dtype)


if __name__ == "__main__":
    B, C, H, W = 4, 64, 16, 16
    reduction = 16
    Ch = C // reduction  # 4

    key = jax.random.PRNGKey(0)
    kx, k1, kb1, k2, kb2 = jax.random.split(key, 5)

    x = jax.random.normal(kx, (B, C, H, W), dtype=jnp.float32)

    # Deterministic parameter init (PyTorch-Linear-style uniform ranges),
    # stored already transposed for y @ W form.
    lim1 = 1.0 / jnp.sqrt(C)
    w1 = jax.random.uniform(k1, (C, Ch), minval=-lim1, maxval=lim1, dtype=jnp.float32)
    b1 = jax.random.uniform(kb1, (1, Ch), minval=-lim1, maxval=lim1, dtype=jnp.float32)
    lim2 = 1.0 / jnp.sqrt(Ch)
    w2 = jax.random.uniform(k2, (Ch, C), minval=-lim2, maxval=lim2, dtype=jnp.float32)
    b2 = jax.random.uniform(kb2, (1, C), minval=-lim2, maxval=lim2, dtype=jnp.float32)

    out = se_layer(x, w1, b1, w2, b2)
    out = jax.block_until_ready(out)

    ref = reference_se(x, w1, b1, w2, b2)
    assert out.shape == (B, C, H, W)
    assert jnp.allclose(out, ref, atol=1e-5, rtol=1e-5), "mismatch vs reference"

    print("KERNEL_OK")
</pallas_src>

<mosaic_0001>
module attributes {stable_mosaic.version = 11 : i64} {
  func.func @se_kernel(%arg0: i32, %arg1: memref<4x64x256xf32, #tpu.memory_space<vmem>>, %arg2: memref<64x4xf32, #tpu.memory_space<vmem>>, %arg3: memref<1x4xf32, #tpu.memory_space<vmem>>, %arg4: memref<4x64xf32, #tpu.memory_space<vmem>>, %arg5: memref<1x64xf32, #tpu.memory_space<vmem>>, %arg6: memref<4x64x256xf32, #tpu.memory_space<vmem>>) attributes {dimension_semantics = [#tpu.dimension_semantics<parallel>], iteration_bounds = array<i64: 1>, scalar_prefetch = 0 : i64, scratch_operands = 0 : i64, tpu.core_type = #tpu.core_type<tc>, window_params = [{transform_indices = @transform_0, window_bounds = array<i64: 4, 64, 256>}, {pipeline_mode = #tpu.pipeline_mode<synchronous>, transform_indices = @transform_1, window_bounds = array<i64: 64, 4>}, {pipeline_mode = #tpu.pipeline_mode<synchronous>, transform_indices = @transform_2, window_bounds = array<i64: 1, 4>}, {pipeline_mode = #tpu.pipeline_mode<synchronous>, transform_indices = @transform_3, window_bounds = array<i64: 4, 64>}, {pipeline_mode = #tpu.pipeline_mode<synchronous>, transform_indices = @transform_4, window_bounds = array<i64: 1, 64>}, {transform_indices = @transform_5, window_bounds = array<i64: 4, 64, 256>}]} {
    %c0 = arith.constant 0 : index
    %c0_0 = arith.constant 0 : index
    %c0_1 = arith.constant 0 : index
    %0 = vector.load %arg1[%c0, %c0_0, %c0_1] : memref<4x64x256xf32, #tpu.memory_space<vmem>>, vector<4x64x256xf32>
    %cst = arith.constant dense<0.000000e+00> : vector<4x64xf32>
    %1 = vector.multi_reduction <add>, %0, %cst [2] : vector<4x64x256xf32> to vector<4x64xf32>
    %cst_2 = arith.constant 3.906250e-03 : f32
    %2 = vector.broadcast %cst_2 : f32 to vector<4x64xf32>
    %3 = arith.mulf %1, %2 : vector<4x64xf32>
    %c0_3 = arith.constant 0 : index
    %c0_4 = arith.constant 0 : index
    %4 = vector.load %arg2[%c0_3, %c0_4] : memref<64x4xf32, #tpu.memory_space<vmem>>, vector<64x4xf32>
    %cst_5 = arith.constant dense<0.000000e+00> : vector<4x4xf32>
    %5 = tpu.matmul %3, %4, %cst_5 {dimension_numbers = #tpu.dot_dimension_numbers<[1], [0], [0], [1], [0, 0, 1, 1], [], []>} : vector<4x64xf32>, vector<64x4xf32>, vector<4x4xf32> -> vector<4x4xf32>
    %c0_6 = arith.constant 0 : index
    %c0_7 = arith.constant 0 : index
    %6 = vector.load %arg3[%c0_6, %c0_7] : memref<1x4xf32, #tpu.memory_space<vmem>>, vector<1x4xf32>
    %7 = vector.broadcast %6 : vector<1x4xf32> to vector<4x4xf32>
    %8 = arith.addf %5, %7 : vector<4x4xf32>
    %cst_8 = arith.constant 0.000000e+00 : f32
    %9 = vector.broadcast %cst_8 : f32 to vector<4x4xf32>
    %10 = arith.maximumf %8, %9 : vector<4x4xf32>
    %c0_9 = arith.constant 0 : index
    %c0_10 = arith.constant 0 : index
    %11 = vector.load %arg4[%c0_9, %c0_10] : memref<4x64xf32, #tpu.memory_space<vmem>>, vector<4x64xf32>
    %cst_11 = arith.constant dense<0.000000e+00> : vector<4x64xf32>
    %12 = tpu.matmul %10, %11, %cst_11 {dimension_numbers = #tpu.dot_dimension_numbers<[1], [0], [0], [1], [0, 0, 1, 1], [], []>} : vector<4x4xf32>, vector<4x64xf32>, vector<4x64xf32> -> vector<4x64xf32>
    %c0_12 = arith.constant 0 : index
    %c0_13 = arith.constant 0 : index
    %13 = vector.load %arg5[%c0_12, %c0_13] : memref<1x64xf32, #tpu.memory_space<vmem>>, vector<1x64xf32>
    %14 = vector.broadcast %13 : vector<1x64xf32> to vector<4x64xf32>
    %15 = arith.addf %12, %14 : vector<4x64xf32>
    %16 = arith.negf %15 : vector<4x64xf32>
    %17 = math.exp %16 : vector<4x64xf32>
    %cst_14 = arith.constant 1.000000e+00 : f32
    %18 = vector.broadcast %cst_14 : f32 to vector<4x64xf32>
    %19 = arith.addf %18, %17 : vector<4x64xf32>
    %20 = arith.divf %18, %19 : vector<4x64xf32>
    %21 = vector.shape_cast %20 : vector<4x64xf32> to vector<4x64x1xf32>
    %22 = vector.broadcast %21 : vector<4x64x1xf32> to vector<4x64x256xf32>
    %23 = arith.mulf %0, %22 : vector<4x64x256xf32>
    %c0_15 = arith.constant 0 : index
    %c0_16 = arith.constant 0 : index
    %c0_17 = arith.constant 0 : index
    %24 = vector.load %arg6[%c0_15, %c0_16, %c0_17] : memref<4x64x256xf32, #tpu.memory_space<vmem>>, vector<4x64x256xf32>
    tpu.vector_store %arg6[%c0_15, %c0_16, %c0_17], %23 {strides = array<i32>} : memref<4x64x256xf32, #tpu.memory_space<vmem>>, vector<4x64x256xf32>,
    return
  }
  func.func @transform_0(%arg0: i32) -> (i32, i32, i32) {
    %c0_i32 = arith.constant 0 : i32
    %c0_i32_0 = arith.constant 0 : i32
    %c0_i32_1 = arith.constant 0 : i32
    return %arg0, %c0_i32, %c0_i32_0 : i32, i32, i32
  }
  func.func @transform_1(%arg0: i32) -> (i32, i32) {
    %c0_i32 = arith.constant 0 : i32
    %c0_i32_0 = arith.constant 0 : i32
    %c0_i32_1 = arith.constant 0 : i32
    return %c0_i32, %c0_i32_0 : i32, i32
  }
  func.func @transform_2(%arg0: i32) -> (i32, i32) {
    %c0_i32 = arith.constant 0 : i32
    %c0_i32_0 = arith.constant 0 : i32
    %c0_i32_1 = arith.constant 0 : i32
    return %c0_i32, %c0_i32_0 : i32, i32
  }
  func.func @transform_3(%arg0: i32) -> (i32, i32) {
    %c0_i32 = arith.constant 0 : i32
    %c0_i32_0 = arith.constant 0 : i32
    %c0_i32_1 = arith.constant 0 : i32
    return %c0_i32, %c0_i32_0 : i32, i32
  }
  func.func @transform_4(%arg0: i32) -> (i32, i32) {
    %c0_i32 = arith.constant 0 : i32
    %c0_i32_0 = arith.constant 0 : i32
    %c0_i32_1 = arith.constant 0 : i32
    return %c0_i32, %c0_i32_0 : i32, i32
  }
  func.func @transform_5(%arg0: i32) -> (i32, i32, i32) {
    %c0_i32 = arith.constant 0 : i32
    %c0_i32_0 = arith.constant 0 : i32
    %c0_i32_1 = arith.constant 0 : i32
    return %arg0, %c0_i32, %c0_i32_0 : i32, i32, i32
  }
}

</mosaic_0001>

<llo_original>
// kernel: tpu_custom_call.1
$region0: #{tpu_custom_call.1}
  #allocation0 [shape = 'u32[]', space=smem, size = 0x4, offset = 0x4, fixed_abs, tag = 'smem constant byte address 0x4 - core index']
  #allocation1 [shape = 'u32[72,128]{1,0:T(1,128)}', space=vmem, size = 0x9000, scoped, tag = 'internal scratch']
  %s0 = inlined_call_operand.hbm [shape: f32[4,64,256], index: 0, kind: input, shape index: {}]
  %s1 = inlined_call_operand.vmem [shape: f32[64,4], index: 1, kind: input, shape index: {}]
  %s2 = inlined_call_operand.vmem [shape: f32[1,4], index: 2, kind: input, shape index: {}]
  %s3 = inlined_call_operand.vmem [shape: f32[4,64], index: 3, kind: input, shape index: {}]
  %s4 = inlined_call_operand.vmem [shape: f32[1,64], index: 4, kind: input, shape index: {}]
  %s5 = inlined_call_operand.hbm [shape: f32[4,64,256], index: 5, kind: output, shape index: {}]
  %s6 = sld [smem:[#allocation0]]
  $region34: #{tpu_custom_call.1} parent=0
    _
  %s8 = ssub.s32 1, %s6
  %s9 = scalar_select 0, %s8, %s6
  $region1: #{tpu_custom_call.1} parent=0
    #allocation2 [shape = 'u8[262144]{0}', space=vmem, size = 0x40000, scoped, tag = 'input window, operand 0, single buffered']
    #allocation3 [shape = 's32[1]{0}', space=sflag, size = 0x4, scoped, tag = 'scoped memory for tpu_custom_call.1']
    #allocation4 [shape = 's32[1]{0}', space=sflag, size = 0x4, scoped, tag = 'scoped memory for tpu_custom_call.1']
    #allocation5 [shape = 'u8[262144]{0}', space=vmem, size = 0x40000, scoped, tag = 'output window, operand 0, single buffered']
    %10 = vsyncpa [#allocation3], 0
    %11 = vsyncpa [#allocation4], 0
    // Predicated region
    $region2: #{tpu_custom_call.1} parent=1 // pred_check
      _
    $region3: #{tpu_custom_call.1} parent=1 // pred_check_branch
      %13 = sbr.rel (0) target = $region5
    $region4: #{tpu_custom_call.1} parent=1 // pred_region
      %15 = vsyncadd [#allocation3], 0
      %s16 = sshll.u32 %s0, 4
      %s17 = int_to_ptr.hbm [resolvable:$true] %s16
      %s18 = sshll.u32 [#allocation2], 4
      %s19 = int_to_ptr.vmem [resolvable:$true] %s18
      %24 = dma.hbm_to_vmem [thread:$0]  %s17, 8192, %s19, [#allocation3], 256, 256, 16
    $region5: #{tpu_custom_call.1} parent=1 // pred_fallthru
      _
    // Predicated region
    $region6: #{tpu_custom_call.1} parent=1 // pred_check
      _
    $region7: #{tpu_custom_call.1} parent=1 // pred_check_branch
      %26 = sbr.rel (0) target = $region9
    $region8: #{tpu_custom_call.1} parent=1 // pred_region
      _
    $region9: #{tpu_custom_call.1} parent=1 // pred_fallthru
      _
    // Predicated region
    $region10: #{tpu_custom_call.1} parent=1 // pred_check
      _
    $region11: #{tpu_custom_call.1} parent=1 // pred_check_branch
      %28 = sbr.rel (0) target = $region13
    $region12: #{tpu_custom_call.1} parent=1 // pred_region
      _
    $region13: #{tpu_custom_call.1} parent=1 // pred_fallthru
      _
    // Predicated region
    $region14: #{tpu_custom_call.1} parent=1 // pred_check
      _
    $region15: #{tpu_custom_call.1} parent=1 // pred_check_branch
      %30 = sbr.rel (0) target = $region17
    $region16: #{tpu_custom_call.1} parent=1 // pred_region
      _
    $region17: #{tpu_custom_call.1} parent=1 // pred_fallthru
      _
    // Predicated region
    $region18: #{tpu_custom_call.1} parent=1 // pred_check
      _
    $region19: #{tpu_custom_call.1} parent=1 // pred_check_branch
      %32 = sbr.rel (0) target = $region21
    $region20: #{tpu_custom_call.1} parent=1 // pred_region
      _
    $region21: #{tpu_custom_call.1} parent=1 // pred_fallthru
      _
    // Predicated region
    $region22: #{tpu_custom_call.1} parent=1 // pred_check
      _
    $region23: #{tpu_custom_call.1} parent=1 // pred_check_branch
      %34 = sbr.rel (0) target = $region25
    $region24: #{tpu_custom_call.1} parent=1 // pred_region
      %36 = dma.done [#allocation3], 8192
    $region25: #{tpu_custom_call.1} parent=1 // pred_fallthru
      _
    %v37 = vld [vmem:[#allocation2] sm:$0xff]
    %v38 = vld [vmem:[#allocation2 + $0x8] sm:$0xff]
    %v39 = vld [vmem:[#allocation2 + $0x10] sm:$0xff]
    %v40 = vld [vmem:[#allocation2 + $0x18] sm:$0xff]
    %v41 = vld [vmem:[#allocation2 + $0x20] sm:$0xff]
    %v42 = vld [vmem:[#allocation2 + $0x28] sm:$0xff]
    %v43 = vld [vmem:[#allocation2 + $0x30] sm:$0xff]
    %v44 = vld [vmem:[#allocation2 + $0x38] sm:$0xff]
    %v45 = vld [vmem:[#allocation2 + $0x40] sm:$0xff]
    %v46 = vld [vmem:[#allocation2 + $0x48] sm:$0xff]
    %v47 = vld [vmem:[#allocation2 + $0x50] sm:$0xff]
    %v48 = vld [vmem:[#allocation2 + $0x58] sm:$0xff]
    %v49 = vld [vmem:[#allocation2 + $0x60] sm:$0xff]
    %v50 = vld [vmem:[#allocation2 + $0x68] sm:$0xff]
    %v51 = vld [vmem:[#allocation2 + $0x70] sm:$0xff]
    %v52 = vld [vmem:[#allocation2 + $0x78] sm:$0xff]
    %v53 = vld [vmem:[#allocation2 + $0x80] sm:$0xff]
    %v54 = vld [vmem:[#allocation2 + $0x88] sm:$0xff]
    %v55 = vld [vmem:[#allocation2 + $0x90] sm:$0xff]
    %v56 = vld [vmem:[#allocation2 + $0x98] sm:$0xff]
    %v57 = vld [vmem:[#allocation2 + $0xa0] sm:$0xff]
    %v58 = vld [vmem:[#allocation2 + $0xa8] sm:$0xff]
    %v59 = vld [vmem:[#allocation2 + $0xb0] sm:$0xff]
    %v60 = vld [vmem:[#allocation2 + $0xb8] sm:$0xff]
    %v61 = vld [vmem:[#allocation2 + $0xc0] sm:$0xff]
    %v62 = vld [vmem:[#allocation2 + $0xc8] sm:$0xff]
    %v63 = vld [vmem:[#allocation2 + $0xd0] sm:$0xff]
    %v64 = vld [vmem:[#allocation2 + $0xd8] sm:$0xff]
    %v65 = vld [vmem:[#allocation2 + $0xe0] sm:$0xff]
    %v66 = vld [vmem:[#allocation2 + $0xe8] sm:$0xff]
    %v67 = vld [vmem:[#allocation2 + $0xf0] sm:$0xff]
    %v68 = vld [vmem:[#allocation2 + $0xf8] sm:$0xff]
    %v69 = vld [vmem:[#allocation2 + $0x100] sm:$0xff]
    %v70 = vld [vmem:[#allocation2 + $0x108] sm:$0xff]
    %v71 = vld [vmem:[#allocation2 + $0x110] sm:$0xff]
    %v72 = vld [vmem:[#allocation2 + $0x118] sm:$0xff]
    %v73 = vld [vmem:[#allocation2 + $0x120] sm:$0xff]
    %v74 = vld [vmem:[#allocation2 + $0x128] sm:$0xff]
    %v75 = vld [vmem:[#allocation2 + $0x130] sm:$0xff]
    %v76 = vld [vmem:[#allocation2 + $0x138] sm:$0xff]
    %v77 = vld [vmem:[#allocation2 + $0x140] sm:$0xff]
    %v78 = vld [vmem:[#allocation2 + $0x148] sm:$0xff]
    %v79 = vld [vmem:[#allocation2 + $0x150] sm:$0xff]
    %v80 = vld [vmem:[#allocation2 + $0x158] sm:$0xff]
    %v81 = vld [vmem:[#allocation2 + $0x160] sm:$0xff]
    %v82 = vld [vmem:[#allocation2 + $0x168] sm:$0xff]
    %v83 = vld [vmem:[#allocation2 + $0x170] sm:$0xff]
    %v84 = vld [vmem:[#allocation2 + $0x178] sm:$0xff]
    %v85 = vld [vmem:[#allocation2 + $0x180] sm:$0xff]
    %v86 = vld [vmem:[#allocation2 + $0x188] sm:$0xff]
    %v87 = vld [vmem:[#allocation2 + $0x190] sm:$0xff]
    %v88 = vld [vmem:[#allocation2 + $0x198] sm:$0xff]
    %v89 = vld [vmem:[#allocation2 + $0x1a0] sm:$0xff]
    %v90 = vld [vmem:[#allocation2 + $0x1a8] sm:$0xff]
    %v91 = vld [vmem:[#allocation2 + $0x1b0] sm:$0xff]
    %v92 = vld [vmem:[#allocation2 + $0x1b8] sm:$0xff]
    %v93 = vld [vmem:[#allocation2 + $0x1c0] sm:$0xff]
    %v94 = vld [vmem:[#allocation2 + $0x1c8] sm:$0xff]
    %v95 = vld [vmem:[#allocation2 + $0x1d0] sm:$0xff]
    %v96 = vld [vmem:[#allocation2 + $0x1d8] sm:$0xff]
    %v97 = vld [vmem:[#allocation2 + $0x1e0] sm:$0xff]
    %v98 = vld [vmem:[#allocation2 + $0x1e8] sm:$0xff]
    %v99 = vld [vmem:[#allocation2 + $0x1f0] sm:$0xff]
    %v100 = vld [vmem:[#allocation2 + $0x1f8] sm:$0xff]
    %v101 = vadd.f32 %v37, %v38
    %102 = vadd.xlane.f32.xlu0 %v101
    %v103 = vpop.xlane.xlu0 %102
    %v104 = vadd.f32 %v39, %v40
    %105 = vadd.xlane.f32.xlu0 %v104
    %v106 = vpop.xlane.xlu0 %105
    %v107 = vadd.f32 %v41, %v42
    %108 = vadd.xlane.f32.xlu0 %v107
    %v109 = vpop.xlane.xlu0 %108
    %v110 = vadd.f32 %v43, %v44
    %111 = vadd.xlane.f32.xlu0 %v110
    %v112 = vpop.xlane.xlu0 %111
    %v113 = vadd.f32 %v45, %v46
    %114 = vadd.xlane.f32.xlu0 %v113
    %v115 = vpop.xlane.xlu0 %114
    %v116 = vadd.f32 %v47, %v48
    %117 = vadd.xlane.f32.xlu0 %v116
    %v118 = vpop.xlane.xlu0 %117
    %v119 = vadd.f32 %v49, %v50
    %120 = vadd.xlane.f32.xlu0 %v119
    %v121 = vpop.xlane.xlu0 %120
    %v122 = vadd.f32 %v51, %v52
    %123 = vadd.xlane.f32.xlu0 %v122
    %v124 = vpop.xlane.xlu0 %123
    %v125 = vadd.f32 %v53, %v54
    %126 = vadd.xlane.f32.xlu0 %v125
    %v127 = vpop.xlane.xlu0 %126
    %v128 = vadd.f32 %v55, %v56
    %129 = vadd.xlane.f32.xlu0 %v128
    %v130 = vpop.xlane.xlu0 %129
    %v131 = vadd.f32 %v57, %v58
    %132 = vadd.xlane.f32.xlu0 %v131
    %v133 = vpop.xlane.xlu0 %132
    %v134 = vadd.f32 %v59, %v60
    %135 = vadd.xlane.f32.xlu0 %v134
    %v136 = vpop.xlane.xlu0 %135
    %v137 = vadd.f32 %v61, %v62
    %138 = vadd.xlane.f32.xlu0 %v137
    %v139 = vpop.xlane.xlu0 %138
    %v140 = vadd.f32 %v63, %v64
    %141 = vadd.xlane.f32.xlu0 %v140
    %v142 = vpop.xlane.xlu0 %141
    %v143 = vadd.f32 %v65, %v66
    %144 = vadd.xlane.f32.xlu0 %v143
    %v145 = vpop.xlane.xlu0 %144
    %v146 = vadd.f32 %v67, %v68
    %147 = vadd.xlane.f32.xlu0 %v146
    %v148 = vpop.xlane.xlu0 %147
    %v149 = vadd.f32 %v69, %v70
    %150 = vadd.xlane.f32.xlu0 %v149
    %v151 = vpop.xlane.xlu0 %150
    %v152 = vadd.f32 %v71, %v72
    %153 = vadd.xlane.f32.xlu0 %v152
    %v154 = vpop.xlane.xlu0 %153
    %v155 = vadd.f32 %v73, %v74
    %156 = vadd.xlane.f32.xlu0 %v155
    %v157 = vpop.xlane.xlu0 %156
    %v158 = vadd.f32 %v75, %v76
    %159 = vadd.xlane.f32.xlu0 %v158
    %v160 = vpop.xlane.xlu0 %159
    %v161 = vadd.f32 %v77, %v78
    %162 = vadd.xlane.f32.xlu0 %v161
    %v163 = vpop.xlane.xlu0 %162
    %v164 = vadd.f32 %v79, %v80
    %165 = vadd.xlane.f32.xlu0 %v164
    %v166 = vpop.xlane.xlu0 %165
    %v167 = vadd.f32 %v81, %v82
    %168 = vadd.xlane.f32.xlu0 %v167
    %v169 = vpop.xlane.xlu0 %168
    %v170 = vadd.f32 %v83, %v84
    %171 = vadd.xlane.f32.xlu0 %v170
    %v172 = vpop.xlane.xlu0 %171
    %v173 = vadd.f32 %v85, %v86
    %174 = vadd.xlane.f32.xlu0 %v173
    %v175 = vpop.xlane.xlu0 %174
    %v176 = vadd.f32 %v87, %v88
    %177 = vadd.xlane.f32.xlu0 %v176
    %v178 = vpop.xlane.xlu0 %177
    %v179 = vadd.f32 %v89, %v90
    %180 = vadd.xlane.f32.xlu0 %v179
    %v181 = vpop.xlane.xlu0 %180
    %v182 = vadd.f32 %v91, %v92
    %183 = vadd.xlane.f32.xlu0 %v182
    %v184 = vpop.xlane.xlu0 %183
    %v185 = vadd.f32 %v93, %v94
    %186 = vadd.xlane.f32.xlu0 %v185
    %v187 = vpop.xlane.xlu0 %186
    %v188 = vadd.f32 %v95, %v96
    %189 = vadd.xlane.f32.xlu0 %v188
    %v190 = vpop.xlane.xlu0 %189
    %v191 = vadd.f32 %v97, %v98
    %192 = vadd.xlane.f32.xlu0 %v191
    %v193 = vpop.xlane.xlu0 %192
    %v194 = vadd.f32 %v99, %v100
    %195 = vadd.xlane.f32.xlu0 %v194
    %v196 = vpop.xlane.xlu0 %195
    %v197 = vmul.f32 %v103, 0.00390625
    %v198 = vmul.f32 %v106, 0.00390625
    %v199 = vmul.f32 %v109, 0.00390625
    %v200 = vmul.f32 %v112, 0.00390625
    %v201 = vmul.f32 %v115, 0.00390625
    %v202 = vmul.f32 %v118, 0.00390625
    %v203 = vmul.f32 %v121, 0.00390625
    %v204 = vmul.f32 %v124, 0.00390625
    %v205 = vmul.f32 %v127, 0.00390625
    %v206 = vmul.f32 %v130, 0.00390625
    %v207 = vmul.f32 %v133, 0.00390625
    %v208 = vmul.f32 %v136, 0.00390625
    %v209 = vmul.f32 %v139, 0.00390625
    %v210 = vmul.f32 %v142, 0.00390625
    %v211 = vmul.f32 %v145, 0.00390625
    %v212 = vmul.f32 %v148, 0.00390625
    %v213 = vmul.f32 %v151, 0.00390625
    %v214 = vmul.f32 %v154, 0.00390625
    %v215 = vmul.f32 %v157, 0.00390625
    %v216 = vmul.f32 %v160, 0.00390625
    %v217 = vmul.f32 %v163, 0.00390625
    %v218 = vmul.f32 %v166, 0.00390625
    %v219 = vmul.f32 %v169, 0.00390625
    %v220 = vmul.f32 %v172, 0.00390625
    %v221 = vmul.f32 %v175, 0.00390625
    %v222 = vmul.f32 %v178, 0.00390625
    %v223 = vmul.f32 %v181, 0.00390625
    %v224 = vmul.f32 %v184, 0.00390625
    %v225 = vmul.f32 %v187, 0.00390625
    %v226 = vmul.f32 %v190, 0.00390625
    %v227 = vmul.f32 %v193, 0.00390625
    %v228 = vmul.f32 %v196, 0.00390625
    %v229 = vld [vmem:[%s1] sm:$0xff]
    %v230 = vld [vmem:[%s1 + $0x8] sm:$0xff]
    %v231 = vld [vmem:[%s1 + $0x10] sm:$0xff]
    %v232 = vld [vmem:[%s1 + $0x18] sm:$0xff]
    %v233 = vld [vmem:[%s1 + $0x20] sm:$0xff]
    %v234 = vld [vmem:[%s1 + $0x28] sm:$0xff]
    %v235 = vld [vmem:[%s1 + $0x30] sm:$0xff]
    %v236 = vld [vmem:[%s1 + $0x38] sm:$0xff]
    %v237 = vld [vmem:[%s2] sm:$0x1]
    %v239 = vperm.slane %v237, 0
    %v273 = vlaneseq
    %v274 = vand.u32 %v273, 127
    %v275 = vperm.slane %v197, %v274
    %v276 = vadd.s32 %v274, 4294967288
    %v277 = vperm.slane %v198, %v276
    %vm278 = vcmask 130112
    %v279 = vsel %vm278, %v277, %v275
    %v280 = vadd.s32 %v274, 4294967280
    %v281 = vperm.slane %v199, %v280
    %vm282 = vcmask 195712
    %v283 = vsel %vm282, %v281, %v279
    %v284 = vadd.s32 %v274, 4294967272
    %v285 = vperm.slane %v200, %v284
    %vm286 = vcmask 261312
    %v287 = vsel %vm286, %v285, %v283
    %v288 = vadd.s32 %v274, 4294967264
    %v289 = vperm.slane %v201, %v288
    %vm290 = vcmask 326912
    %v291 = vsel %vm290, %v289, %v287
    %v292 = vadd.s32 %v274, 4294967256
    %v293 = vperm.slane %v202, %v292
    %vm294 = vcmask 392512
    %v295 = vsel %vm294, %v293, %v291
    %v296 = vadd.s32 %v274, 4294967248
    %v297 = vperm.slane %v203, %v296
    %vm298 = vcmask 458112
    %v299 = vsel %vm298, %v297, %v295
    %v300 = vadd.s32 %v274, 4294967240
    %v301 = vperm.slane %v204, %v300
    %vm302 = vcmask 523712
    %v303 = vsel %vm302, %v301, %v299
    %v304 = vperm.slane %v205, %v274
    %v305 = vperm.slane %v206, %v276
    %v306 = vsel %vm278, %v305, %v304
    %v307 = vperm.slane %v207, %v280
    %v308 = vsel %vm282, %v307, %v306
    %v309 = vperm.slane %v208, %v284
    %v310 = vsel %vm286, %v309, %v308
    %v311 = vperm.slane %v209, %v288
    %v312 = vsel %vm290, %v311, %v310
    %v313 = vperm.slane %v210, %v292
    %v314 = vsel %vm294, %v313, %v312
    %v315 = vperm.slane %v211, %v296
    %v316 = vsel %vm298, %v315, %v314
    %v317 = vperm.slane %v212, %v300
    %v318 = vsel %vm302, %v317, %v316
    %v319 = vperm.slane %v213, %v274
    %v320 = vperm.slane %v214, %v276
    %v321 = vsel %vm278, %v320, %v319
    %v322 = vperm.slane %v215, %v280
    %v323 = vsel %vm282, %v322, %v321
    %v324 = vperm.slane %v216, %v284
    %v325 = vsel %vm286, %v324, %v323
    %v326 = vperm.slane %v217, %v288
    %v327 = vsel %vm290, %v326, %v325
    %v328 = vperm.slane %v218, %v292
    %v329 = vsel %vm294, %v328, %v327
    %v330 = vperm.slane %v219, %v296
    %v331 = vsel %vm298, %v330, %v329
    %v332 = vperm.slane %v220, %v300
    %v333 = vsel %vm302, %v332, %v331
    %v334 = vperm.slane %v221, %v274
    %v335 = vperm.slane %v222, %v276
    %v336 = vsel %vm278, %v335, %v334
    %v337 = vperm.slane %v223, %v280
    %v338 = vsel %vm282, %v337, %v336
    %v339 = vperm.slane %v224, %v284
    %v340 = vsel %vm286, %v339, %v338
    %v341 = vperm.slane %v225, %v288
    %v342 = vsel %vm290, %v341, %v340
    %v343 = vperm.slane %v226, %v292
    %v344 = vsel %vm294, %v343, %v342
    %v345 = vperm.slane %v227, %v296
    %v346 = vsel %vm298, %v345, %v344
    %v347 = vperm.slane %v228, %v300
    %v348 = vsel %vm302, %v347, %v346
    %vm349 = vcmask 1041409
    %v350 = vsel %vm349, %v318, %v303
    %vm351 = vcmask 1042434
    %v352 = vsel %vm351, %v333, %v350
    %vm353 = vcmask 1043459
    %v354 = vsel %vm353, %v348, %v352
    %vm355 = vcmask 523264
    %v356 = vsel %vm355, %v354, 0
    %358 = vmatpush.msra.mxu0 0.0
    %359 = vmatpush.msra.mxu0 0.0
    %360 = vmatpush.msra.mxu0 0.0
    %361 = vmatpush.msra.mxu0 0.0
    %362 = vmatpush.msra.mxu0 0.0
    %363 = vmatpush.msra.mxu0 0.0
    %364 = vmatpush.msra.mxu0 0.0
    %365 = vmatpush.msra.mxu0 0.0
    %366 = vmatpush.msra.mxu0 %v236
    %367 = vmatpush.msra.mxu0 %v235
    %368 = vmatpush.msra.mxu0 %v234
    %369 = vmatpush.msra.mxu0 %v233
    %370 = vmatpush.msra.mxu0 %v232
    %371 = vmatpush.msra.mxu0 %v231
    %372 = vmatpush.msra.mxu0 %v230
    %373 = vmatpush.msra.mxu0 %v229
    %374 = vmatmul.f32.gmra.mxu0 %v356
    %v375 = vpop.f32.mrf.mxu0
    %v376 = vadd.f32 %v239, %v375
    %377 = vdwg.mxu0
    %v378 = vmax.f32 %v376, 0.0
    %v379 = vld [vmem:[%s3] sm:$0xf]
    %v380 = vld [vmem:[%s4] sm:$0x1]
    %v382 = vperm.slane %v380, 0
    %vm384 = vcmask 31744
    %v386 = vsel %vm384, %v378, 0
    %vm388 = vcmask 1043456
    %v390 = vsel %vm388, %v379, 0
    %392 = vmatpush.msra.mxu0 0.0
    %393 = vmatpush.msra.mxu0 0.0
    %394 = vmatpush.msra.mxu0 0.0
    %395 = vmatpush.msra.mxu0 0.0
    %396 = vmatpush.msra.mxu0 0.0
    %397 = vmatpush.msra.mxu0 0.0
    %398 = vmatpush.msra.mxu0 0.0
    %399 = vmatpush.msra.mxu0 0.0
    %400 = vmatpush.msra.mxu0 0.0
    %401 = vmatpush.msra.mxu0 0.0
    %402 = vmatpush.msra.mxu0 0.0
    %403 = vmatpush.msra.mxu0 0.0
    %404 = vmatpush.msra.mxu0 0.0
    %405 = vmatpush.msra.mxu0 0.0
    %406 = vmatpush.msra.mxu0 0.0
    %407 = vmatpush.msra.mxu0 %v390
    %408 = vmatmul.f32.gmra.mxu0 %v386
    %v409 = vpop.f32.mrf.mxu0
    %v410 = vadd.f32 %v382, %v409
    %411 = vdwg.mxu0
    %v412 = vxor.u32 %v410, 2147483648
    %v413 = vmul.f32 %v412, 1.442695
    %v414 = vpow.pop %v413
    %v415 = vadd.f32 %v414, 1.0
    %v416 = vrcp.pop %v415
    %v417 = vmul.f32 %v415, %v416
    %v418 = vsub.f32 1.0, %v417
    %v419 = vmul.f32 %v416, %v418
    %v420 = vadd.f32 %v416, %v419
    %vm421 = vweird.f32 %v415
    %vm422 = vweird.f32 %v416
    %vm423 = vmor %vm421, %vm422
    %v424 = vsel %vm423, %v416, %v420
    %v425 = vand.u32 2147483647, %v415
    %vm426 = vcmp.eq.f32.partialorder %v425, 8.507059e+37
    %v427 = vand.u32 %v415, 2147483648
    %v428 = vor.u32 1.1754944e-38, %v427
    %v429 = vsel %vm426, %v428, %v424
    %v430 = vmul.f32 1.0, %v429
    %v431 = vperm.slane %v430, 0
    %v432 = vlaneseq
    %v433 = vshrl.u32 %v432, 7
    %435 = vset.pattern.permute.xlu0 %v433
    %436 = vperm.xlu0 %435, %v431
    %v437 = vpop.permute.xlu0 %436
    %v438 = vlaneseq
    %v439 = vshrl.u32 %v438, 7
    %v440 = vadd.s32 %v439, 8
    %441 = vset.pattern.permute.xlu0 %v440
    %442 = vperm.xlu0 %441, %v431
    %v443 = vpop.permute.xlu0 %442
    %v444 = vlaneseq
    %v445 = vshrl.u32 %v444, 7
    %v446 = vadd.s32 %v445, 16
    %447 = vset.pattern.permute.xlu0 %v446
    %448 = vperm.xlu0 %447, %v431
    %v449 = vpop.permute.xlu0 %448
    %v450 = vlaneseq
    %v451 = vshrl.u32 %v450, 7
    %v452 = vadd.s32 %v451, 24
    %453 = vset.pattern.permute.xlu0 %v452
    %454 = vperm.xlu0 %453, %v431
    %v455 = vpop.permute.xlu0 %454
    %v456 = vlaneseq
    %v457 = vshrl.u32 %v456, 7
    %v458 = vadd.s32 %v457, 32
    %459 = vset.pattern.permute.xlu0 %v458
    %460 = vperm.xlu0 %459, %v431
    %v461 = vpop.permute.xlu0 %460
    %v462 = vlaneseq
    %v463 = vshrl.u32 %v462, 7
    %v464 = vadd.s32 %v463, 40
    %465 = vset.pattern.permute.xlu0 %v464
    %466 = vperm.xlu0 %465, %v431
    %v467 = vpop.permute.xlu0 %466
    %v468 = vlaneseq
    %v469 = vshrl.u32 %v468, 7
    %v470 = vadd.s32 %v469, 48
    %471 = vset.pattern.permute.xlu0 %v470
    %472 = vperm.xlu0 %471, %v431
    %v473 = vpop.permute.xlu0 %472
    %v474 = vlaneseq
    %v475 = vshrl.u32 %v474, 7
    %v476 = vadd.s32 %v475, 56
    %477 = vset.pattern.permute.xlu0 %v476
    %478 = vperm.xlu0 %477, %v431
    %v479 = vpop.permute.xlu0 %478
    %v480 = vperm.slane %v430, 1
    %v481 = vlaneseq
    %v482 = vshrl.u32 %v481, 7
    %484 = vset.pattern.permute.xlu0 %v482
    %485 = vperm.xlu0 %484, %v480
    %v486 = vpop.permute.xlu0 %485
    %v487 = vlaneseq
    %v488 = vshrl.u32 %v487, 7
    %v489 = vadd.s32 %v488, 8
    %490 = vset.pattern.permute.xlu0 %v489
    %491 = vperm.xlu0 %490, %v480
    %v492 = vpop.permute.xlu0 %491
    %v493 = vlaneseq
    %v494 = vshrl.u32 %v493, 7
    %v495 = vadd.s32 %v494, 16
    %496 = vset.pattern.permute.xlu0 %v495
    %497 = vperm.xlu0 %496, %v480
    %v498 = vpop.permute.xlu0 %497
    %v499 = vlaneseq
    %v500 = vshrl.u32 %v499, 7
    %v501 = vadd.s32 %v500, 24
    %502 = vset.pattern.permute.xlu0 %v501
    %503 = vperm.xlu0 %502, %v480
    %v504 = vpop.permute.xlu0 %503
    %v505 = vlaneseq
    %v506 = vshrl.u32 %v505, 7
    %v507 = vadd.s32 %v506, 32
    %508 = vset.pattern.permute.xlu0 %v507
    %509 = vperm.xlu0 %508, %v480
    %v510 = vpop.permute.xlu0 %509
    %v511 = vlaneseq
    %v512 = vshrl.u32 %v511, 7
    %v513 = vadd.s32 %v512, 40
    %514 = vset.pattern.permute.xlu0 %v513
    %515 = vperm.xlu0 %514, %v480
    %v516 = vpop.permute.xlu0 %515
    %v517 = vlaneseq
    %v518 = vshrl.u32 %v517, 7
    %v519 = vadd.s32 %v518, 48
    %520 = vset.pattern.permute.xlu0 %v519
    %521 = vperm.xlu0 %520, %v480
    %v522 = vpop.permute.xlu0 %521
    %v523 = vlaneseq
    %v524 = vshrl.u32 %v523, 7
    %v525 = vadd.s32 %v524, 56
    %526 = vset.pattern.permute.xlu0 %v525
    %527 = vperm.xlu0 %526, %v480
    %v528 = vpop.permute.xlu0 %527
    %v529 = vperm.slane %v430, 2
    %v530 = vlaneseq
    %v531 = vshrl.u32 %v530, 7
    %533 = vset.pattern.permute.xlu0 %v531
    %534 = vperm.xlu0 %533, %v529
    %v535 = vpop.permute.xlu0 %534
    %v536 = vlaneseq
    %v537 = vshrl.u32 %v536, 7
    %v538 = vadd.s32 %v537, 8
    %539 = vset.pattern.permute.xlu0 %v538
    %540 = vperm.xlu0 %539, %v529
    %v541 = vpop.permute.xlu0 %540
    %v542 = vlaneseq
    %v543 = vshrl.u32 %v542, 7
    %v544 = vadd.s32 %v543, 16
    %545 = vset.pattern.permute.xlu0 %v544
    %546 = vperm.xlu0 %545, %v529
    %v547 = vpop.permute.xlu0 %546
    %v548 = vlaneseq
    %v549 = vshrl.u32 %v548, 7
    %v550 = vadd.s32 %v549, 24
    %551 = vset.pattern.permute.xlu0 %v550
    %552 = vperm.xlu0 %551, %v529
    %v553 = vpop.permute.xlu0 %552
    %v554 = vlaneseq
    %v555 = vshrl.u32 %v554, 7
    %v556 = vadd.s32 %v555, 32
    %557 = vset.pattern.permute.xlu0 %v556
    %558 = vperm.xlu0 %557, %v529
    %v559 = vpop.permute.xlu0 %558
    %v560 = vlaneseq
    %v561 = vshrl.u32 %v560, 7
    %v562 = vadd.s32 %v561, 40
    %563 = vset.pattern.permute.xlu0 %v562
    %564 = vperm.xlu0 %563, %v529
    %v565 = vpop.permute.xlu0 %564
    %v566 = vlaneseq
    %v567 = vshrl.u32 %v566, 7
    %v568 = vadd.s32 %v567, 48
    %569 = vset.pattern.permute.xlu0 %v568
    %570 = vperm.xlu0 %569, %v529
    %v571 = vpop.permute.xlu0 %570
    %v572 = vlaneseq
    %v573 = vshrl.u32 %v572, 7
    %v574 = vadd.s32 %v573, 56
    %575 = vset.pattern.permute.xlu0 %v574
    %576 = vperm.xlu0 %575, %v529
    %v577 = vpop.permute.xlu0 %576
    %v578 = vperm.slane %v430, 3
    %v579 = vlaneseq
    %v580 = vshrl.u32 %v579, 7
    %582 = vset.pattern.permute.xlu0 %v580
    %583 = vperm.xlu0 %582, %v578
    %v584 = vpop.permute.xlu0 %583
    %v585 = vlaneseq
    %v586 = vshrl.u32 %v585, 7
    %v587 = vadd.s32 %v586, 8
    %588 = vset.pattern.permute.xlu0 %v587
    %589 = vperm.xlu0 %588, %v578
    %v590 = vpop.permute.xlu0 %589
    %v591 = vlaneseq
    %v592 = vshrl.u32 %v591, 7
    %v593 = vadd.s32 %v592, 16
    %594 = vset.pattern.permute.xlu0 %v593
    %595 = vperm.xlu0 %594, %v578
    %v596 = vpop.permute.xlu0 %595
    %v597 = vlaneseq
    %v598 = vshrl.u32 %v597, 7
    %v599 = vadd.s32 %v598, 24
    %600 = vset.pattern.permute.xlu0 %v599
    %601 = vperm.xlu0 %600, %v578
    %v602 = vpop.permute.xlu0 %601
    %v603 = vlaneseq
    %v604 = vshrl.u32 %v603, 7
    %v605 = vadd.s32 %v604, 32
    %606 = vset.pattern.permute.xlu0 %v605
    %607 = vperm.xlu0 %606, %v578
    %v608 = vpop.permute.xlu0 %607
    %v609 = vlaneseq
    %v610 = vshrl.u32 %v609, 7
    %v611 = vadd.s32 %v610, 40
    %612 = vset.pattern.permute.xlu0 %v611
    %613 = vperm.xlu0 %612, %v578
    %v614 = vpop.permute.xlu0 %613
    %v615 = vlaneseq
    %v616 = vshrl.u32 %v615, 7
    %v617 = vadd.s32 %v616, 48
    %618 = vset.pattern.permute.xlu0 %v617
    %619 = vperm.xlu0 %618, %v578
    %v620 = vpop.permute.xlu0 %619
    %v621 = vlaneseq
    %v622 = vshrl.u32 %v621, 7
    %v623 = vadd.s32 %v622, 56
    %624 = vset.pattern.permute.xlu0 %v623
    %625 = vperm.xlu0 %624, %v578
    %v626 = vpop.permute.xlu0 %625
    %v627 = vmul.f32 %v37, %v437
    %v628 = vmul.f32 %v38, %v437
    %v629 = vmul.f32 %v39, %v443
    %v630 = vmul.f32 %v40, %v443
    %v631 = vmul.f32 %v41, %v449
    %v632 = vmul.f32 %v42, %v449
    %v633 = vmul.f32 %v43, %v455
    %v634 = vmul.f32 %v44, %v455
    %v635 = vmul.f32 %v45, %v461
    %v636 = vmul.f32 %v46, %v461
    %v637 = vmul.f32 %v47, %v467
    %v638 = vmul.f32 %v48, %v467
    %v639 = vmul.f32 %v49, %v473
    %v640 = vmul.f32 %v50, %v473
    %v641 = vmul.f32 %v51, %v479
    %v642 = vmul.f32 %v52, %v479
    %v643 = vmul.f32 %v53, %v486
    %v644 = vmul.f32 %v54, %v486
    %v645 = vmul.f32 %v55, %v492
    %v646 = vmul.f32 %v56, %v492
    %v647 = vmul.f32 %v57, %v498
    %v648 = vmul.f32 %v58, %v498
    %v649 = vmul.f32 %v59, %v504
    %v650 = vmul.f32 %v60, %v504
    %v651 = vmul.f32 %v61, %v510
    %v652 = vmul.f32 %v62, %v510
    %v653 = vmul.f32 %v63, %v516
    %v654 = vmul.f32 %v64, %v516
    %v655 = vmul.f32 %v65, %v522
    %v656 = vmul.f32 %v66, %v522
    %v657 = vmul.f32 %v67, %v528
    %v658 = vmul.f32 %v68, %v528
    %v659 = vmul.f32 %v69, %v535
    %v660 = vmul.f32 %v70, %v535
    %v661 = vmul.f32 %v71, %v541
    %v662 = vmul.f32 %v72, %v541
    %v663 = vmul.f32 %v73, %v547
    %v664 = vmul.f32 %v74, %v547
    %v665 = vmul.f32 %v75, %v553
    %v666 = vmul.f32 %v76, %v553
    %v667 = vmul.f32 %v77, %v559
    %v668 = vmul.f32 %v78, %v559
    %v669 = vmul.f32 %v79, %v565
    %v670 = vmul.f32 %v80, %v565
    %v671 = vmul.f32 %v81, %v571
    %v672 = vmul.f32 %v82, %v571
    %v673 = vmul.f32 %v83, %v577
    %v674 = vmul.f32 %v84, %v577
    %v675 = vmul.f32 %v85, %v584
    %v676 = vmul.f32 %v86, %v584
    %v677 = vmul.f32 %v87, %v590
    %v678 = vmul.f32 %v88, %v590
    %v679 = vmul.f32 %v89, %v596
    %v680 = vmul.f32 %v90, %v596
    %v681 = vmul.f32 %v91, %v602
    %v682 = vmul.f32 %v92, %v602
    %v683 = vmul.f32 %v93, %v608
    %v684 = vmul.f32 %v94, %v608
    %v685 = vmul.f32 %v95, %v614
    %v686 = vmul.f32 %v96, %v614
    %v687 = vmul.f32 %v97, %v620
    %v688 = vmul.f32 %v98, %v620
    %v689 = vmul.f32 %v99, %v626
    %v690 = vmul.f32 %v100, %v626
    %691 = vst [vmem:[#allocation5] sm:$0xff] %v627
    %692 = vst [vmem:[#allocation5 + $0x8] sm:$0xff] %v628
    %693 = vst [vmem:[#allocation5 + $0x10] sm:$0xff] %v629
    %694 = vst [vmem:[#allocation5 + $0x18] sm:$0xff] %v630
    %695 = vst [vmem:[#allocation5 + $0x20] sm:$0xff] %v631
    %696 = vst [vmem:[#allocation5 + $0x28] sm:$0xff] %v632
    %697 = vst [vmem:[#allocation5 + $0x30] sm:$0xff] %v633
    %698 = vst [vmem:[#allocation5 + $0x38] sm:$0xff] %v634
    %699 = vst [vmem:[#allocation5 + $0x40] sm:$0xff] %v635
    %700 = vst [vmem:[#allocation5 + $0x48] sm:$0xff] %v636
    %701 = vst [vmem:[#allocation5 + $0x50] sm:$0xff] %v637
    %702 = vst [vmem:[#allocation5 + $0x58] sm:$0xff] %v638
    %703 = vst [vmem:[#allocation5 + $0x60] sm:$0xff] %v639
    %704 = vst [vmem:[#allocation5 + $0x68] sm:$0xff] %v640
    %705 = vst [vmem:[#allocation5 + $0x70] sm:$0xff] %v641
    %706 = vst [vmem:[#allocation5 + $0x78] sm:$0xff] %v642
    %707 = vst [vmem:[#allocation5 + $0x80] sm:$0xff] %v643
    %708 = vst [vmem:[#allocation5 + $0x88] sm:$0xff] %v644
    %709 = vst [vmem:[#allocation5 + $0x90] sm:$0xff] %v645
    %710 = vst [vmem:[#allocation5 + $0x98] sm:$0xff] %v646
    %711 = vst [vmem:[#allocation5 + $0xa0] sm:$0xff] %v647
    %712 = vst [vmem:[#allocation5 + $0xa8] sm:$0xff] %v648
    %713 = vst [vmem:[#allocation5 + $0xb0] sm:$0xff] %v649
    %714 = vst [vmem:[#allocation5 + $0xb8] sm:$0xff] %v650
    %715 = vst [vmem:[#allocation5 + $0xc0] sm:$0xff] %v651
    %716 = vst [vmem:[#allocation5 + $0xc8] sm:$0xff] %v652
    %717 = vst [vmem:[#allocation5 + $0xd0] sm:$0xff] %v653
    %718 = vst [vmem:[#allocation5 + $0xd8] sm:$0xff] %v654
    %719 = vst [vmem:[#allocation5 + $0xe0] sm:$0xff] %v655
    %720 = vst [vmem:[#allocation5 + $0xe8] sm:$0xff] %v656
    %721 = vst [vmem:[#allocation5 + $0xf0] sm:$0xff] %v657
    %722 = vst [vmem:[#allocation5 + $0xf8] sm:$0xff] %v658
    %723 = vst [vmem:[#allocation5 + $0x100] sm:$0xff] %v659
    %724 = vst [vmem:[#allocation5 + $0x108] sm:$0xff] %v660
    %725 = vst [vmem:[#allocation5 + $0x110] sm:$0xff] %v661
    %726 = vst [vmem:[#allocation5 + $0x118] sm:$0xff] %v662
    %727 = vst [vmem:[#allocation5 + $0x120] sm:$0xff] %v663
    %728 = vst [vmem:[#allocation5 + $0x128] sm:$0xff] %v664
    %729 = vst [vmem:[#allocation5 + $0x130] sm:$0xff] %v665
    %730 = vst [vmem:[#allocation5 + $0x138] sm:$0xff] %v666
    %731 = vst [vmem:[#allocation5 + $0x140] sm:$0xff] %v667
    %732 = vst [vmem:[#allocation5 + $0x148] sm:$0xff] %v668
    %733 = vst [vmem:[#allocation5 + $0x150] sm:$0xff] %v669
    %734 = vst [vmem:[#allocation5 + $0x158] sm:$0xff] %v670
    %735 = vst [vmem:[#allocation5 + $0x160] sm:$0xff] %v671
    %736 = vst [vmem:[#allocation5 + $0x168] sm:$0xff] %v672
    %737 = vst [vmem:[#allocation5 + $0x170] sm:$0xff] %v673
    %738 = vst [vmem:[#allocation5 + $0x178] sm:$0xff] %v674
    %739 = vst [vmem:[#allocation5 + $0x180] sm:$0xff] %v675
    %740 = vst [vmem:[#allocation5 + $0x188] sm:$0xff] %v676
    %741 = vst [vmem:[#allocation5 + $0x190] sm:$0xff] %v677
    %742 = vst [vmem:[#allocation5 + $0x198] sm:$0xff] %v678
    %743 = vst [vmem:[#allocation5 + $0x1a0] sm:$0xff] %v679
    %744 = vst [vmem:[#allocation5 + $0x1a8] sm:$0xff] %v680
    %745 = vst [vmem:[#allocation5 + $0x1b0] sm:$0xff] %v681
    %746 = vst [vmem:[#allocation5 + $0x1b8] sm:$0xff] %v682
    %747 = vst [vmem:[#allocation5 + $0x1c0] sm:$0xff] %v683
    %748 = vst [vmem:[#allocation5 + $0x1c8] sm:$0xff] %v684
    %749 = vst [vmem:[#allocation5 + $0x1d0] sm:$0xff] %v685
    %750 = vst [vmem:[#allocation5 + $0x1d8] sm:$0xff] %v686
    %751 = vst [vmem:[#allocation5 + $0x1e0] sm:$0xff] %v687
    %752 = vst [vmem:[#allocation5 + $0x1e8] sm:$0xff] %v688
    %753 = vst [vmem:[#allocation5 + $0x1f0] sm:$0xff] %v689
    %754 = vst [vmem:[#allocation5 + $0x1f8] sm:$0xff] %v690
    // Predicated region
    $region26: #{tpu_custom_call.1} parent=1 // pred_check
      _
    $region27: #{tpu_custom_call.1} parent=1 // pred_check_branch
      %756 = sbr.rel (0) target = $region29
    $region28: #{tpu_custom_call.1} parent=1 // pred_region
      %758 = vsyncadd [#allocation4], 0
      %s759 = sshll.u32 [#allocation5], 4
      %s760 = int_to_ptr.vmem [resolvable:$true] %s759
      %s761 = sshll.u32 %s5, 4
      %s762 = int_to_ptr.hbm [resolvable:$true] %s761
      %767 = dma.vmem_to_hbm [thread:$0]  %s760, 8192, %s762, [#allocation4], 256, 256, 16
    $region29: #{tpu_custom_call.1} parent=1 // pred_fallthru
      _
    // Predicated region
    $region30: #{tpu_custom_call.1} parent=1 // pred_check
      _
    $region31: #{tpu_custom_call.1} parent=1 // pred_check_branch
      %769 = sbr.rel (0) target = $region33
    $region32: #{tpu_custom_call.1} parent=1 // pred_region
      %771 = dma.done [#allocation4], 8192
    $region33: #{tpu_custom_call.1} parent=1 // pred_fallthru
      _
    %772 = vsyncpa [#allocation3], 1
    %773 = vsyncpa [#allocation4], 1

</llo_original>
